<compile_context>
chip_gen: v5e
topology: v5e:2x2
jax: 0.10.0
libtpu: 0.0.40
codegen_flags: <defaults>
</compile_context>

<pallas_src>
import math

import jax
import jax.numpy as jnp
from jax.experimental import pallas as pl
from jax.experimental.pallas import tpu as pltpu


# ---------------------------------------------------------------------------
# Parameter setup (plain JAX glue) — exactly mirrors the reference __init__.
# ---------------------------------------------------------------------------
def build_pe(max_seq_len: int, d_model: int) -> jnp.ndarray:
    pos = jnp.arange(0, max_seq_len, dtype=jnp.float32)[:, None]          # (L, 1)
    # NOTE: intentionally mirrors the reference's formula (scale outside exp()),
    # including its overflow behavior for very large d_model.
    div_term = jnp.exp(jnp.arange(0, d_model, 2, dtype=jnp.float32)) * (
        -math.log(10000.0) / d_model
    )                                                                      # (D/2,)
    pe = jnp.zeros((max_seq_len, d_model), dtype=jnp.float32)
    pe = pe.at[:, 0::2].set(jnp.sin(pos * div_term))
    pe = pe.at[:, 1::2].set(jnp.cos(pos * div_term))
    return pe[None, :, :]                                                  # (1, L, D)


def prepare_pe(pe: jnp.ndarray, seq_len: int, dtype) -> jnp.ndarray:
    """Slice to seq_len, match dtype, flatten lane-dense to (1, S*D).

    Hoisted out of the per-call path: compute once per (seq_len, dtype) and reuse.
    """
    # TODO(synk): PyTorch's `x + pe` promotes non-f32 x to float32; here pe is cast
    # down to x.dtype (bit-exact for f32, differs for bf16 mixed precision).
    d_model = pe.shape[-1]
    return pe[:, :seq_len, :].astype(dtype).reshape(1, seq_len * d_model)


# ---------------------------------------------------------------------------
# Kernel: elementwise broadcast add on a lane-dense 2-D slab.
# ---------------------------------------------------------------------------
def _add_pe_kernel(x_ref, pe_ref, o_ref):
    # x_ref: (TB, TN), pe_ref: (1, TN) -> broadcast over sublanes (batch rows).
    o_ref[...] = x_ref[...] + pe_ref[...]


_BLOCK_BUDGET_BYTES = 2 * 1024 * 1024   # ~2 MiB per x block.
# Pipelined working set ~= 2*(x block) + 2*(out block) + 2*(pe row) <= ~9 MiB,
# comfortably inside every chip's scoped-VMEM default (v5e 16 MiB, v6e/v7x 32 MiB)
# and v7x's 64 MiB physical VMEM, so no vmem_limit_bytes override is needed.


def _choose_tiles(B: int, N: int, itemsize: int):
    """Pick (TB, TN) that are (8,128)-friendly and fit the per-block VMEM budget."""
    budget_elems = max(1024, _BLOCK_BUDGET_BYTES // itemsize)

    # The batch tile must be a multiple of 8 (or the full dim when B < 8), so
    # reserve at least that many sublane rows before bounding the lane tile.
    min_rows = B if B < 8 else 8
    lane_budget = max(128, budget_elems // max(min_rows, 1))

    # Lane tile: the full dim when it fits, otherwise the largest multiple of 128
    # under the budget (independent of N's divisor structure; the ragged last
    # block produced by pl.cdiv is safe for a pure elementwise add).
    if N <= lane_budget or N < 128:
        tn = N
    else:
        tn = (lane_budget // 128) * 128

    # Batch (sublane) tile: a multiple of 8 (or the full dim) chosen so that
    # tb * tn * itemsize stays within the per-block budget.
    rows_budget = max(min_rows, budget_elems // max(tn, 1))
    if B < 8:
        tb = B
    elif B % 8 == 0 and B <= rows_budget:
        tb = B
    else:
        tb = max(8, min(B // 8, rows_budget // 8) * 8)
    return tb, tn


def positional_encoding_forward(x: jnp.ndarray, pe_flat: jnp.ndarray) -> jnp.ndarray:
    """x: (B, S, D); pe_flat: (1, S*D) from prepare_pe (already in x.dtype)."""
    B, S, D = x.shape
    N = S * D
    assert pe_flat.shape == (1, N) and pe_flat.dtype == x.dtype

    x_flat = x.reshape(B, N)                               # lane-dense: (B, S*D)
    tb, tn = _choose_tiles(B, N, jnp.dtype(x.dtype).itemsize)

    # Lane tiles on the OUTER axis, batch tiles inner: pe's block index depends only
    # on the outer axis, so pe stays resident in VMEM across the inner batch loop
    # (no redundant pe DMAs).
    grid = (pl.cdiv(N, tn), pl.cdiv(B, tb))

    out_flat = pl.pallas_call(
        _add_pe_kernel,
        out_shape=jax.ShapeDtypeStruct((B, N), x.dtype),
        grid_spec=pltpu.PrefetchScalarGridSpec(
            num_scalar_prefetch=0,
            grid=grid,
            in_specs=[
                pl.BlockSpec((tb, tn), lambda j, i: (i, j)),   # x
                pl.BlockSpec((1, tn), lambda j, i: (0, j)),    # pe (resident across i)
            ],
            out_specs=pl.BlockSpec((tb, tn), lambda j, i: (i, j)),
        ),
        # Output has identical shape/dtype to x_flat: reuse its HBM buffer.
        input_output_aliases={0: 0},
        compiler_params=pltpu.CompilerParams(
            dimension_semantics=("parallel", "parallel"),      # shards across v7x's 2 TCs
        ),
    )(x_flat, pe_flat)

    return out_flat.reshape(B, S, D)


if __name__ == "__main__":
    max_seq_len = 550
    d_model = 32
    dropout_rate = 0.1  # identity in eval mode
    B, S = 2, 8

    key = jax.random.PRNGKey(0)
    k0, k1, k2 = jax.random.split(key, 3)

    pe = build_pe(max_seq_len, d_model)

    # Primary demo shape (matches the module defaults): batch=2, seq=8, d_model=32.
    x = jax.random.normal(k0, (B, S, d_model), dtype=jnp.float32)
    pe_flat = prepare_pe(pe, S, x.dtype)          # hoisted out of the per-call path
    ref = x + pe[:, :S, :]                        # reference computed before kernel call
    out = jax.block_until_ready(positional_encoding_forward(x, pe_flat))
    assert out.shape == (B, S, d_model)
    assert jnp.allclose(out, ref, atol=1e-6), "mismatch vs reference (small shape)"

    # Multiple-of-8 batch path (single big tile).
    B2, S2 = 16, 16
    x2 = jax.random.normal(k1, (B2, S2, d_model), dtype=jnp.float32)
    pe_flat2 = prepare_pe(pe, S2, x2.dtype)
    ref2 = x2 + pe[:, :S2, :]
    out2 = jax.block_until_ready(positional_encoding_forward(x2, pe_flat2))
    assert jnp.allclose(out2, ref2, atol=1e-6), "mismatch vs reference (B=16 shape)"

    # Ragged batch-tile path (B not a multiple of 8 -> tb=8, cdiv grid with a
    # partially-covered last block; writes outside B are discarded).
    B3, S3 = 10, 16
    x3 = jax.random.normal(k2, (B3, S3, d_model), dtype=jnp.float32)
    pe_flat3 = prepare_pe(pe, S3, x3.dtype)
    ref3 = x3 + pe[:, :S3, :]
    out3 = jax.block_until_ready(positional_encoding_forward(x3, pe_flat3))
    assert jnp.allclose(out3, ref3, atol=1e-6), "mismatch vs reference (ragged B=10)"

    print("KERNEL_OK")
</pallas_src>

<mosaic_0001>
module attributes {stable_mosaic.version = 11 : i64} {
  func.func @_add_pe_kernel(%arg0: i32, %arg1: i32, %arg2: memref<2x256xf32, #tpu.memory_space<vmem>>, %arg3: memref<1x256xf32, #tpu.memory_space<vmem>>, %arg4: memref<2x256xf32, #tpu.memory_space<vmem>>) attributes {dimension_semantics = [#tpu.dimension_semantics<parallel>, #tpu.dimension_semantics<parallel>], iteration_bounds = array<i64: 1, 1>, scalar_prefetch = 0 : i64, scratch_operands = 0 : i64, tpu.core_type = #tpu.core_type<tc>, window_params = [{transform_indices = @transform_0, window_bounds = array<i64: 2, 256>}, {transform_indices = @transform_1, window_bounds = array<i64: 1, 256>}, {transform_indices = @transform_2, window_bounds = array<i64: 2, 256>}]} {
    %c0 = arith.constant 0 : index
    %c0_0 = arith.constant 0 : index
    %0 = vector.load %arg2[%c0, %c0_0] : memref<2x256xf32, #tpu.memory_space<vmem>>, vector<2x256xf32>
    %c0_1 = arith.constant 0 : index
    %c0_2 = arith.constant 0 : index
    %1 = vector.load %arg3[%c0_1, %c0_2] : memref<1x256xf32, #tpu.memory_space<vmem>>, vector<1x256xf32>
    %2 = vector.broadcast %1 : vector<1x256xf32> to vector<2x256xf32>
    %3 = arith.addf %0, %2 : vector<2x256xf32>
    %c0_3 = arith.constant 0 : index
    %c0_4 = arith.constant 0 : index
    %4 = vector.load %arg4[%c0_3, %c0_4] : memref<2x256xf32, #tpu.memory_space<vmem>>, vector<2x256xf32>
    tpu.vector_store %arg4[%c0_3, %c0_4], %3 {strides = array<i32>} : memref<2x256xf32, #tpu.memory_space<vmem>>, vector<2x256xf32>,
    return
  }
  func.func @transform_0(%arg0: i32, %arg1: i32) -> (i32, i32) {
    %c0_i32 = arith.constant 0 : i32
    return %arg1, %arg0 : i32, i32
  }
  func.func @transform_1(%arg0: i32, %arg1: i32) -> (i32, i32) {
    %c0_i32 = arith.constant 0 : i32
    %c0_i32_0 = arith.constant 0 : i32
    return %c0_i32, %arg0 : i32, i32
  }
  func.func @transform_2(%arg0: i32, %arg1: i32) -> (i32, i32) {
    %c0_i32 = arith.constant 0 : i32
    return %arg1, %arg0 : i32, i32
  }
}

</mosaic_0001>

<llo_original>
// kernel: tpu_custom_call.1
$region0: #{tpu_custom_call.1}
  #allocation0 [shape = 'u32[]', space=smem, size = 0x4, offset = 0x4, fixed_abs, tag = 'smem constant byte address 0x4 - core index']
  #allocation1 [shape = 'u32[72,128]{1,0:T(1,128)}', space=vmem, size = 0x9000, scoped, tag = 'internal scratch']
  %s0 = inlined_call_operand.hbm [shape: f32[2,256], index: 0, kind: input, shape index: {}, may-alias: {0,2}]
  %s1 = inlined_call_operand.vmem [shape: f32[1,256], index: 1, kind: input, shape index: {}]
  %s2 = inlined_call_operand.hbm [shape: f32[2,256], index: 2, kind: output, shape index: {}, may-alias: {0,2}]
  %s3 = sld [smem:[#allocation0]]
  $region22: #{tpu_custom_call.1} parent=0
    _
  %s5 = ssub.s32 1, %s3
  %s6 = scalar_select 0, %s5, %s3
  $region1: #{tpu_custom_call.1} parent=0
    #allocation2 [shape = 'u8[2048]{0}', space=vmem, size = 0x800, scoped, tag = 'input window, operand 0, single buffered']
    #allocation3 [shape = 's32[1]{0}', space=sflag, size = 0x4, scoped, tag = 'scoped memory for tpu_custom_call.1']
    #allocation4 [shape = 's32[1]{0}', space=sflag, size = 0x4, scoped, tag = 'scoped memory for tpu_custom_call.1']
    #allocation5 [shape = 'u8[2048]{0}', space=vmem, size = 0x800, scoped, tag = 'output window, operand 0, single buffered']
    %7 = vsyncpa [#allocation3], 0
    %8 = vsyncpa [#allocation4], 0
    // Predicated region
    $region2: #{tpu_custom_call.1} parent=1 // pred_check
      _
    $region3: #{tpu_custom_call.1} parent=1 // pred_check_branch
      %10 = sbr.rel (0) target = $region5
    $region4: #{tpu_custom_call.1} parent=1 // pred_region
      %12 = vsyncadd [#allocation3], 0
      %s14 = sshll.u32 %s0, 4
      %s15 = int_to_ptr.hbm [resolvable:$true] %s14
      %s16 = sshll.u32 [#allocation2], 4
      %s17 = int_to_ptr.vmem [resolvable:$true] %s16
      %19 = dma.hbm_to_vmem [thread:$0]  %s15, 64, %s17, [#allocation3]
    $region5: #{tpu_custom_call.1} parent=1 // pred_fallthru
      _
    // Predicated region
    $region6: #{tpu_custom_call.1} parent=1 // pred_check
      _
    $region7: #{tpu_custom_call.1} parent=1 // pred_check_branch
      %21 = sbr.rel (0) target = $region9
    $region8: #{tpu_custom_call.1} parent=1 // pred_region
      _
    $region9: #{tpu_custom_call.1} parent=1 // pred_fallthru
      _
    // Predicated region
    $region10: #{tpu_custom_call.1} parent=1 // pred_check
      _
    $region11: #{tpu_custom_call.1} parent=1 // pred_check_branch
      %23 = sbr.rel (0) target = $region13
    $region12: #{tpu_custom_call.1} parent=1 // pred_region
      %25 = dma.done [#allocation3], 64
    $region13: #{tpu_custom_call.1} parent=1 // pred_fallthru
      _
    %v26 = vld [vmem:[#allocation2] sm:$0xf]
    %v27 = vld [vmem:[%s1] sm:$0x3]
    %v29 = vperm.slane %v27, 0
    %v30 = vperm.slane %v27, 1
    %v31 = vrot.slane %v30, 6
    %vm32 = vcmask 1041408
    %v33 = vsel %vm32, %v29, %v31
    %v35 = vadd.f32 %v26, %v33
    %36 = vst [vmem:[#allocation5] sm:$0xf] %v35
    // Predicated region
    $region14: #{tpu_custom_call.1} parent=1 // pred_check
      _
    $region15: #{tpu_custom_call.1} parent=1 // pred_check_branch
      %38 = sbr.rel (0) target = $region17
    $region16: #{tpu_custom_call.1} parent=1 // pred_region
      %40 = vsyncadd [#allocation4], 0
      %s42 = sshll.u32 [#allocation5], 4
      %s43 = int_to_ptr.vmem [resolvable:$true] %s42
      %s44 = sshll.u32 %s2, 4
      %s45 = int_to_ptr.hbm [resolvable:$true] %s44
      %47 = dma.vmem_to_hbm [thread:$0]  %s43, 64, %s45, [#allocation4]
    $region17: #{tpu_custom_call.1} parent=1 // pred_fallthru
      _
    // Predicated region
    $region18: #{tpu_custom_call.1} parent=1 // pred_check
      _
    $region19: #{tpu_custom_call.1} parent=1 // pred_check_branch
      %49 = sbr.rel (0) target = $region21
    $region20: #{tpu_custom_call.1} parent=1 // pred_region
      %51 = dma.done [#allocation4], 64
    $region21: #{tpu_custom_call.1} parent=1 // pred_fallthru
      _
    %52 = vsyncpa [#allocation3], 1
    %53 = vsyncpa [#allocation4], 1

</llo_original>
